<compile_context>
chip_gen: v5e
topology: v5e:2x2
jax: 0.10.0
libtpu: 0.0.40
codegen_flags: <defaults>
</compile_context>

<pallas_src>
import jax
import jax.numpy as jnp
from jax.experimental import pallas as pl
from jax.experimental.pallas import tpu as pltpu


def mlp_kernel(xt_ref, w1_ref, b1_ref, w2_ref, b2_ref, w3_ref, b3_ref, ot_ref):
    # xt_ref: (4, TB)   w1: (32, 4)  b1: (32, 1)
    # w2: (32, 32) b2: (32, 1)   w3: (2, 32) b3: (2, 1)   ot_ref: (2, TB)
    xt = xt_ref[...]
    w1 = w1_ref[...]
    tb = xt.shape[1]

    # ---- Layer 1: Linear(4, 32) + ReLU on the VPU (K=4 is pure MXU latency). ----
    h1 = jnp.broadcast_to(b1_ref[...], (w1.shape[0], tb))      # hoisted bias broadcast
    for k in range(w1.shape[1]):                                # 4 broadcast FMAs
        h1 = h1 + w1[:, k:k + 1] * xt[k:k + 1, :]
    h1 = jnp.maximum(h1, 0.0)

    # ---- Layer 2: Linear(32, 32) + ReLU, MXU with f32 accumulation. ----
    h2 = jnp.dot(w2_ref[...], h1, preferred_element_type=jnp.float32) + b2_ref[...]
    h2 = jnp.maximum(h2, 0.0)

    # ---- Layer 3: Linear(32, 2), no activation. Lane-dense (2, TB) store. ----
    out = jnp.dot(w3_ref[...], h2, preferred_element_type=jnp.float32) + b3_ref[...]
    ot_ref[...] = out.astype(ot_ref.dtype)


def neural_network_forward(x, params, *, batch_tile=1024):
    """Forward pass. x: (B, 4) float32 (same layout as the torch input).

    params: {"w1": (32,4), "b1": (32,1), "w2": (32,32), "b2": (32,1),
             "w3": (2,32), "b3": (2,1)}  -- native torch nn.Linear layout.
    Returns (B, 2) float32.
    """
    B = x.shape[0]
    w1, b1 = params["w1"], params["b1"]
    w2, b2 = params["w2"], params["b2"]
    w3, b3 = params["w3"], params["b3"]

    # Batch tile: multiple of 128 (lane width); pad B up to a multiple of the tile.
    tb = min(batch_tile, pl.cdiv(B, 128) * 128)
    b_pad = pl.cdiv(B, tb) * tb
    if b_pad != B:
        x = jnp.pad(x, ((0, b_pad - B), (0, 0)))
    xt = x.T  # (4, b_pad): feature-major so the batch is the lane axis in the kernel.

    const = lambda shape: pl.BlockSpec(shape, lambda i: (0, 0))  # VMEM-resident weights

    out_t = pl.pallas_call(
        mlp_kernel,
        out_shape=jax.ShapeDtypeStruct((2, b_pad), jnp.float32),
        grid=(b_pad // tb,),
        in_specs=[
            pl.BlockSpec((4, tb), lambda i: (0, i)),   # x tile, double-buffered
            const(w1.shape), const(b1.shape),
            const(w2.shape), const(b2.shape),
            const(w3.shape), const(b3.shape),
        ],
        out_specs=pl.BlockSpec((2, tb), lambda i: (0, i)),
        compiler_params=pltpu.CompilerParams(
            dimension_semantics=("parallel",)),        # shard batch across TCs on v7x
    )(xt, w1, b1, w2, b2, w3, b3)

    return out_t.T[:B]


def init_params(key):
    """torch.nn.Linear-style init: U(-1/sqrt(fan_in), 1/sqrt(fan_in)).
    Weights in torch (out, in) layout; biases as (out, 1) columns."""
    def linear(k, fan_in, fan_out):
        kw, kb = jax.random.split(k)
        bound = 1.0 / float(fan_in) ** 0.5
        w = jax.random.uniform(kw, (fan_out, fan_in), jnp.float32, -bound, bound)
        b = jax.random.uniform(kb, (fan_out, 1), jnp.float32, -bound, bound)
        return w, b

    k1, k2, k3 = jax.random.split(key, 3)
    w1, b1 = linear(k1, 4, 32)
    w2, b2 = linear(k2, 32, 32)
    w3, b3 = linear(k3, 32, 2)
    return {"w1": w1, "b1": b1, "w2": w2, "b2": b2, "w3": w3, "b3": b3}


def reference_forward(x, p):
    h1 = jnp.maximum(x @ p["w1"].T + p["b1"].T, 0.0)
    h2 = jnp.maximum(h1 @ p["w2"].T + p["b2"].T, 0.0)
    return h2 @ p["w3"].T + p["b3"].T


if __name__ == "__main__":
    key = jax.random.PRNGKey(0)
    kp, kx = jax.random.split(key)

    params = init_params(kp)
    x = jax.random.normal(kx, (8, 4), jnp.float32)   # batch=8, in_features=4

    out = neural_network_forward(x, params)
    out = jax.block_until_ready(out)

    ref = reference_forward(x, params)
    assert out.shape == (8, 2)
    assert jnp.allclose(out, ref, atol=1e-4, rtol=1e-4), "mismatch vs pure-JAX reference"

    print("KERNEL_OK")
</pallas_src>

<mosaic_0001>
module attributes {stable_mosaic.version = 11 : i64} {
  func.func @mlp_kernel(%arg0: i32, %arg1: memref<4x128xf32, #tpu.memory_space<vmem>>, %arg2: memref<32x4xf32, #tpu.memory_space<vmem>>, %arg3: memref<32x1xf32, #tpu.memory_space<vmem>>, %arg4: memref<32x32xf32, #tpu.memory_space<vmem>>, %arg5: memref<32x1xf32, #tpu.memory_space<vmem>>, %arg6: memref<2x32xf32, #tpu.memory_space<vmem>>, %arg7: memref<2x1xf32, #tpu.memory_space<vmem>>, %arg8: memref<2x128xf32, #tpu.memory_space<vmem>>) attributes {dimension_semantics = [#tpu.dimension_semantics<parallel>], iteration_bounds = array<i64: 1>, scalar_prefetch = 0 : i64, scratch_operands = 0 : i64, tpu.core_type = #tpu.core_type<tc>, window_params = [{transform_indices = @transform_0, window_bounds = array<i64: 4, 128>}, {pipeline_mode = #tpu.pipeline_mode<synchronous>, transform_indices = @transform_1, window_bounds = array<i64: 32, 4>}, {pipeline_mode = #tpu.pipeline_mode<synchronous>, transform_indices = @transform_2, window_bounds = array<i64: 32, 1>}, {pipeline_mode = #tpu.pipeline_mode<synchronous>, transform_indices = @transform_3, window_bounds = array<i64: 32, 32>}, {pipeline_mode = #tpu.pipeline_mode<synchronous>, transform_indices = @transform_4, window_bounds = array<i64: 32, 1>}, {pipeline_mode = #tpu.pipeline_mode<synchronous>, transform_indices = @transform_5, window_bounds = array<i64: 2, 32>}, {pipeline_mode = #tpu.pipeline_mode<synchronous>, transform_indices = @transform_6, window_bounds = array<i64: 2, 1>}, {transform_indices = @transform_7, window_bounds = array<i64: 2, 128>}]} {
    %c0 = arith.constant 0 : index
    %c0_0 = arith.constant 0 : index
    %0 = vector.load %arg1[%c0, %c0_0] : memref<4x128xf32, #tpu.memory_space<vmem>>, vector<4x128xf32>
    %c0_1 = arith.constant 0 : index
    %c0_2 = arith.constant 0 : index
    %1 = vector.load %arg2[%c0_1, %c0_2] : memref<32x4xf32, #tpu.memory_space<vmem>>, vector<32x4xf32>
    %c0_3 = arith.constant 0 : index
    %c0_4 = arith.constant 0 : index
    %2 = vector.load %arg3[%c0_3, %c0_4] : memref<32x1xf32, #tpu.memory_space<vmem>>, vector<32x1xf32>
    %3 = vector.shape_cast %2 : vector<32x1xf32> to vector<32x1xf32>
    %4 = vector.broadcast %3 : vector<32x1xf32> to vector<32x128xf32>
    %5 = vector.extract_strided_slice %1 {offsets = [0, 0], sizes = [32, 1], strides = [1, 1]} : vector<32x4xf32> to vector<32x1xf32>
    %6 = vector.extract_strided_slice %0 {offsets = [0, 0], sizes = [1, 128], strides = [1, 1]} : vector<4x128xf32> to vector<1x128xf32>
    %7 = vector.broadcast %5 : vector<32x1xf32> to vector<32x128xf32>
    %8 = vector.broadcast %6 : vector<1x128xf32> to vector<32x128xf32>
    %9 = arith.mulf %7, %8 : vector<32x128xf32>
    %10 = arith.addf %4, %9 : vector<32x128xf32>
    %11 = vector.extract_strided_slice %1 {offsets = [0, 1], sizes = [32, 1], strides = [1, 1]} : vector<32x4xf32> to vector<32x1xf32>
    %12 = vector.extract_strided_slice %0 {offsets = [1, 0], sizes = [1, 128], strides = [1, 1]} : vector<4x128xf32> to vector<1x128xf32>
    %13 = vector.broadcast %11 : vector<32x1xf32> to vector<32x128xf32>
    %14 = vector.broadcast %12 : vector<1x128xf32> to vector<32x128xf32>
    %15 = arith.mulf %13, %14 : vector<32x128xf32>
    %16 = arith.addf %10, %15 : vector<32x128xf32>
    %17 = vector.extract_strided_slice %1 {offsets = [0, 2], sizes = [32, 1], strides = [1, 1]} : vector<32x4xf32> to vector<32x1xf32>
    %18 = vector.extract_strided_slice %0 {offsets = [2, 0], sizes = [1, 128], strides = [1, 1]} : vector<4x128xf32> to vector<1x128xf32>
    %19 = vector.broadcast %17 : vector<32x1xf32> to vector<32x128xf32>
    %20 = vector.broadcast %18 : vector<1x128xf32> to vector<32x128xf32>
    %21 = arith.mulf %19, %20 : vector<32x128xf32>
    %22 = arith.addf %16, %21 : vector<32x128xf32>
    %23 = vector.extract_strided_slice %1 {offsets = [0, 3], sizes = [32, 1], strides = [1, 1]} : vector<32x4xf32> to vector<32x1xf32>
    %24 = vector.extract_strided_slice %0 {offsets = [3, 0], sizes = [1, 128], strides = [1, 1]} : vector<4x128xf32> to vector<1x128xf32>
    %25 = vector.broadcast %23 : vector<32x1xf32> to vector<32x128xf32>
    %26 = vector.broadcast %24 : vector<1x128xf32> to vector<32x128xf32>
    %27 = arith.mulf %25, %26 : vector<32x128xf32>
    %28 = arith.addf %22, %27 : vector<32x128xf32>
    %cst = arith.constant 0.000000e+00 : f32
    %29 = vector.broadcast %cst : f32 to vector<32x128xf32>
    %30 = arith.maximumf %28, %29 : vector<32x128xf32>
    %c0_5 = arith.constant 0 : index
    %c0_6 = arith.constant 0 : index
    %31 = vector.load %arg4[%c0_5, %c0_6] : memref<32x32xf32, #tpu.memory_space<vmem>>, vector<32x32xf32>
    %cst_7 = arith.constant dense<0.000000e+00> : vector<32x128xf32>
    %32 = tpu.matmul %31, %30, %cst_7 {dimension_numbers = #tpu.dot_dimension_numbers<[1], [0], [0], [1], [0, 0, 1, 1], [], []>} : vector<32x32xf32>, vector<32x128xf32>, vector<32x128xf32> -> vector<32x128xf32>
    %c0_8 = arith.constant 0 : index
    %c0_9 = arith.constant 0 : index
    %33 = vector.load %arg5[%c0_8, %c0_9] : memref<32x1xf32, #tpu.memory_space<vmem>>, vector<32x1xf32>
    %34 = vector.broadcast %33 : vector<32x1xf32> to vector<32x128xf32>
    %35 = arith.addf %32, %34 : vector<32x128xf32>
    %cst_10 = arith.constant 0.000000e+00 : f32
    %36 = vector.broadcast %cst_10 : f32 to vector<32x128xf32>
    %37 = arith.maximumf %35, %36 : vector<32x128xf32>
    %c0_11 = arith.constant 0 : index
    %c0_12 = arith.constant 0 : index
    %38 = vector.load %arg6[%c0_11, %c0_12] : memref<2x32xf32, #tpu.memory_space<vmem>>, vector<2x32xf32>
    %cst_13 = arith.constant dense<0.000000e+00> : vector<2x128xf32>
    %39 = tpu.matmul %38, %37, %cst_13 {dimension_numbers = #tpu.dot_dimension_numbers<[1], [0], [0], [1], [0, 0, 1, 1], [], []>} : vector<2x32xf32>, vector<32x128xf32>, vector<2x128xf32> -> vector<2x128xf32>
    %c0_14 = arith.constant 0 : index
    %c0_15 = arith.constant 0 : index
    %40 = vector.load %arg7[%c0_14, %c0_15] : memref<2x1xf32, #tpu.memory_space<vmem>>, vector<2x1xf32>
    %41 = vector.broadcast %40 : vector<2x1xf32> to vector<2x128xf32>
    %42 = arith.addf %39, %41 : vector<2x128xf32>
    %c0_16 = arith.constant 0 : index
    %c0_17 = arith.constant 0 : index
    %43 = vector.load %arg8[%c0_16, %c0_17] : memref<2x128xf32, #tpu.memory_space<vmem>>, vector<2x128xf32>
    tpu.vector_store %arg8[%c0_16, %c0_17], %42 {strides = array<i32>} : memref<2x128xf32, #tpu.memory_space<vmem>>, vector<2x128xf32>,
    return
  }
  func.func @transform_0(%arg0: i32) -> (i32, i32) {
    %c0_i32 = arith.constant 0 : i32
    %c0_i32_0 = arith.constant 0 : i32
    return %c0_i32, %arg0 : i32, i32
  }
  func.func @transform_1(%arg0: i32) -> (i32, i32) {
    %c0_i32 = arith.constant 0 : i32
    %c0_i32_0 = arith.constant 0 : i32
    %c0_i32_1 = arith.constant 0 : i32
    return %c0_i32, %c0_i32_0 : i32, i32
  }
  func.func @transform_2(%arg0: i32) -> (i32, i32) {
    %c0_i32 = arith.constant 0 : i32
    %c0_i32_0 = arith.constant 0 : i32
    %c0_i32_1 = arith.constant 0 : i32
    return %c0_i32, %c0_i32_0 : i32, i32
  }
  func.func @transform_3(%arg0: i32) -> (i32, i32) {
    %c0_i32 = arith.constant 0 : i32
    %c0_i32_0 = arith.constant 0 : i32
    %c0_i32_1 = arith.constant 0 : i32
    return %c0_i32, %c0_i32_0 : i32, i32
  }
  func.func @transform_4(%arg0: i32) -> (i32, i32) {
    %c0_i32 = arith.constant 0 : i32
    %c0_i32_0 = arith.constant 0 : i32
    %c0_i32_1 = arith.constant 0 : i32
    return %c0_i32, %c0_i32_0 : i32, i32
  }
  func.func @transform_5(%arg0: i32) -> (i32, i32) {
    %c0_i32 = arith.constant 0 : i32
    %c0_i32_0 = arith.constant 0 : i32
    %c0_i32_1 = arith.constant 0 : i32
    return %c0_i32, %c0_i32_0 : i32, i32
  }
  func.func @transform_6(%arg0: i32) -> (i32, i32) {
    %c0_i32 = arith.constant 0 : i32
    %c0_i32_0 = arith.constant 0 : i32
    %c0_i32_1 = arith.constant 0 : i32
    return %c0_i32, %c0_i32_0 : i32, i32
  }
  func.func @transform_7(%arg0: i32) -> (i32, i32) {
    %c0_i32 = arith.constant 0 : i32
    %c0_i32_0 = arith.constant 0 : i32
    return %c0_i32, %arg0 : i32, i32
  }
}

</mosaic_0001>

<llo_original>
// kernel: tpu_custom_call.1
$region0: #{tpu_custom_call.1}
  #allocation0 [shape = 'u32[]', space=smem, size = 0x4, offset = 0x4, fixed_abs, tag = 'smem constant byte address 0x4 - core index']
  #allocation1 [shape = 'u32[72,128]{1,0:T(1,128)}', space=vmem, size = 0x9000, scoped, tag = 'internal scratch']
  %s0 = inlined_call_operand.vmem [shape: f32[4,128], index: 0, kind: input, shape index: {}]
  %s1 = inlined_call_operand.vmem [shape: f32[32,4], index: 1, kind: input, shape index: {}]
  %s2 = inlined_call_operand.vmem [shape: f32[32,1], index: 2, kind: input, shape index: {}]
  %s3 = inlined_call_operand.vmem [shape: f32[32,32], index: 3, kind: input, shape index: {}]
  %s4 = inlined_call_operand.vmem [shape: f32[32,1], index: 4, kind: input, shape index: {}]
  %s5 = inlined_call_operand.vmem [shape: f32[2,32], index: 5, kind: input, shape index: {}]
  %s6 = inlined_call_operand.vmem [shape: f32[2,1], index: 6, kind: input, shape index: {}]
  %s7 = inlined_call_operand.hbm [shape: f32[2,128], index: 7, kind: output, shape index: {}]
  %s8 = sld [smem:[#allocation0]]
  $region38: #{tpu_custom_call.1} parent=0
    _
  %s10 = ssub.s32 1, %s8
  %s11 = scalar_select 0, %s10, %s8
  $region1: #{tpu_custom_call.1} parent=0
    #allocation2 [shape = 'u8[1024]{0}', space=vmem, size = 0x400, scoped, tag = 'output window, operand 0, single buffered']
    #allocation3 [shape = 's32[1]{0}', space=sflag, size = 0x4, scoped, tag = 'scoped memory for tpu_custom_call.1']
    %12 = vsyncpa [#allocation3], 0
    // Predicated region
    $region2: #{tpu_custom_call.1} parent=1 // pred_check
      _
    $region3: #{tpu_custom_call.1} parent=1 // pred_check_branch
      %14 = sbr.rel (0) target = $region5
    $region4: #{tpu_custom_call.1} parent=1 // pred_region
      _
    $region5: #{tpu_custom_call.1} parent=1 // pred_fallthru
      _
    // Predicated region
    $region6: #{tpu_custom_call.1} parent=1 // pred_check
      _
    $region7: #{tpu_custom_call.1} parent=1 // pred_check_branch
      %16 = sbr.rel (0) target = $region9
    $region8: #{tpu_custom_call.1} parent=1 // pred_region
      _
    $region9: #{tpu_custom_call.1} parent=1 // pred_fallthru
      _
    // Predicated region
    $region10: #{tpu_custom_call.1} parent=1 // pred_check
      _
    $region11: #{tpu_custom_call.1} parent=1 // pred_check_branch
      %18 = sbr.rel (0) target = $region13
    $region12: #{tpu_custom_call.1} parent=1 // pred_region
      _
    $region13: #{tpu_custom_call.1} parent=1 // pred_fallthru
      _
    // Predicated region
    $region14: #{tpu_custom_call.1} parent=1 // pred_check
      _
    $region15: #{tpu_custom_call.1} parent=1 // pred_check_branch
      %20 = sbr.rel (0) target = $region17
    $region16: #{tpu_custom_call.1} parent=1 // pred_region
      _
    $region17: #{tpu_custom_call.1} parent=1 // pred_fallthru
      _
    // Predicated region
    $region18: #{tpu_custom_call.1} parent=1 // pred_check
      _
    $region19: #{tpu_custom_call.1} parent=1 // pred_check_branch
      %22 = sbr.rel (0) target = $region21
    $region20: #{tpu_custom_call.1} parent=1 // pred_region
      _
    $region21: #{tpu_custom_call.1} parent=1 // pred_fallthru
      _
    // Predicated region
    $region22: #{tpu_custom_call.1} parent=1 // pred_check
      _
    $region23: #{tpu_custom_call.1} parent=1 // pred_check_branch
      %24 = sbr.rel (0) target = $region25
    $region24: #{tpu_custom_call.1} parent=1 // pred_region
      _
    $region25: #{tpu_custom_call.1} parent=1 // pred_fallthru
      _
    // Predicated region
    $region26: #{tpu_custom_call.1} parent=1 // pred_check
      _
    $region27: #{tpu_custom_call.1} parent=1 // pred_check_branch
      %26 = sbr.rel (0) target = $region29
    $region28: #{tpu_custom_call.1} parent=1 // pred_region
      _
    $region29: #{tpu_custom_call.1} parent=1 // pred_fallthru
      _
    %v27 = vld [vmem:[%s0] sm:$0xf]
    %v28 = vld [vmem:[%s1] sm:$0xff]
    %v29 = vld [vmem:[%s1 + $0x8] sm:$0xff]
    %v30 = vld [vmem:[%s1 + $0x10] sm:$0xff]
    %v31 = vld [vmem:[%s1 + $0x18] sm:$0xff]
    %v32 = vld [vmem:[%s2] sm:$0xff]
    %v33 = vld [vmem:[%s2 + $0x8] sm:$0xff]
    %v34 = vld [vmem:[%s2 + $0x10] sm:$0xff]
    %v35 = vld [vmem:[%s2 + $0x18] sm:$0xff]
    %37 = vset.pattern.permute.xlu0 0
    %38 = vperm.xlu0 %37, %v32
    %v39 = vpop.permute.xlu0 %38
    %42 = vset.pattern.permute.xlu0 0
    %43 = vperm.xlu0 %42, %v33
    %v44 = vpop.permute.xlu0 %43
    %47 = vset.pattern.permute.xlu0 0
    %48 = vperm.xlu0 %47, %v34
    %v49 = vpop.permute.xlu0 %48
    %52 = vset.pattern.permute.xlu0 0
    %53 = vperm.xlu0 %52, %v35
    %v54 = vpop.permute.xlu0 %53
    %57 = vset.pattern.permute.xlu0 0
    %58 = vperm.xlu0 %57, %v28
    %v59 = vpop.permute.xlu0 %58
    %62 = vset.pattern.permute.xlu0 0
    %63 = vperm.xlu0 %62, %v29
    %v64 = vpop.permute.xlu0 %63
    %67 = vset.pattern.permute.xlu0 0
    %68 = vperm.xlu0 %67, %v30
    %v69 = vpop.permute.xlu0 %68
    %72 = vset.pattern.permute.xlu0 0
    %73 = vperm.xlu0 %72, %v31
    %v74 = vpop.permute.xlu0 %73
    %v76 = vperm.slane %v27, 0
    %v77 = vmul.f32 %v59, %v76
    %v78 = vmul.f32 %v64, %v76
    %v79 = vmul.f32 %v69, %v76
    %v80 = vmul.f32 %v74, %v76
    %v81 = vadd.f32 %v39, %v77
    %v82 = vadd.f32 %v44, %v78
    %v83 = vadd.f32 %v49, %v79
    %v84 = vadd.f32 %v54, %v80
    %85 = vset.pattern.permute.xlu0 1
    %86 = vperm.xlu0 %85, %v28
    %v87 = vpop.permute.xlu0 %86
    %89 = vset.pattern.permute.xlu0 1
    %90 = vperm.xlu0 %89, %v29
    %v91 = vpop.permute.xlu0 %90
    %93 = vset.pattern.permute.xlu0 1
    %94 = vperm.xlu0 %93, %v30
    %v95 = vpop.permute.xlu0 %94
    %97 = vset.pattern.permute.xlu0 1
    %98 = vperm.xlu0 %97, %v31
    %v99 = vpop.permute.xlu0 %98
    %v101 = vperm.slane %v27, 1
    %v102 = vmul.f32 %v87, %v101
    %v103 = vmul.f32 %v91, %v101
    %v104 = vmul.f32 %v95, %v101
    %v105 = vmul.f32 %v99, %v101
    %v106 = vadd.f32 %v81, %v102
    %v107 = vadd.f32 %v82, %v103
    %v108 = vadd.f32 %v83, %v104
    %v109 = vadd.f32 %v84, %v105
    %110 = vset.pattern.permute.xlu0 2
    %111 = vperm.xlu0 %110, %v28
    %v112 = vpop.permute.xlu0 %111
    %114 = vset.pattern.permute.xlu0 2
    %115 = vperm.xlu0 %114, %v29
    %v116 = vpop.permute.xlu0 %115
    %118 = vset.pattern.permute.xlu0 2
    %119 = vperm.xlu0 %118, %v30
    %v120 = vpop.permute.xlu0 %119
    %122 = vset.pattern.permute.xlu0 2
    %123 = vperm.xlu0 %122, %v31
    %v124 = vpop.permute.xlu0 %123
    %v126 = vperm.slane %v27, 2
    %v127 = vmul.f32 %v112, %v126
    %v128 = vmul.f32 %v116, %v126
    %v129 = vmul.f32 %v120, %v126
    %v130 = vmul.f32 %v124, %v126
    %v131 = vadd.f32 %v106, %v127
    %v132 = vadd.f32 %v107, %v128
    %v133 = vadd.f32 %v108, %v129
    %v134 = vadd.f32 %v109, %v130
    %135 = vset.pattern.permute.xlu0 3
    %136 = vperm.xlu0 %135, %v28
    %v137 = vpop.permute.xlu0 %136
    %139 = vset.pattern.permute.xlu0 3
    %140 = vperm.xlu0 %139, %v29
    %v141 = vpop.permute.xlu0 %140
    %143 = vset.pattern.permute.xlu0 3
    %144 = vperm.xlu0 %143, %v30
    %v145 = vpop.permute.xlu0 %144
    %147 = vset.pattern.permute.xlu0 3
    %148 = vperm.xlu0 %147, %v31
    %v149 = vpop.permute.xlu0 %148
    %v151 = vperm.slane %v27, 3
    %v152 = vmul.f32 %v137, %v151
    %v153 = vmul.f32 %v141, %v151
    %v154 = vmul.f32 %v145, %v151
    %v155 = vmul.f32 %v149, %v151
    %v156 = vadd.f32 %v131, %v152
    %v157 = vadd.f32 %v132, %v153
    %v158 = vadd.f32 %v133, %v154
    %v159 = vadd.f32 %v134, %v155
    %v160 = vmax.f32 %v156, 0.0
    %v161 = vmax.f32 %v157, 0.0
    %v162 = vmax.f32 %v158, 0.0
    %v163 = vmax.f32 %v159, 0.0
    %v164 = vld [vmem:[%s3] sm:$0xff]
    %v165 = vld [vmem:[%s3 + $0x8] sm:$0xff]
    %v166 = vld [vmem:[%s3 + $0x10] sm:$0xff]
    %v167 = vld [vmem:[%s3 + $0x18] sm:$0xff]
    %v168 = vld [vmem:[%s4] sm:$0xff]
    %v169 = vld [vmem:[%s4 + $0x8] sm:$0xff]
    %v170 = vld [vmem:[%s4 + $0x10] sm:$0xff]
    %v171 = vld [vmem:[%s4 + $0x18] sm:$0xff]
    %173 = vset.pattern.permute.xlu0 0
    %174 = vperm.xlu0 %173, %v168
    %v175 = vpop.permute.xlu0 %174
    %178 = vset.pattern.permute.xlu0 0
    %179 = vperm.xlu0 %178, %v169
    %v180 = vpop.permute.xlu0 %179
    %183 = vset.pattern.permute.xlu0 0
    %184 = vperm.xlu0 %183, %v170
    %v185 = vpop.permute.xlu0 %184
    %188 = vset.pattern.permute.xlu0 0
    %189 = vperm.xlu0 %188, %v171
    %v190 = vpop.permute.xlu0 %189
    %vm192 = vcmask 261120
    %v194 = vsel %vm192, %v164, 0
    %v197 = vsel %vm192, %v165, 0
    %v200 = vsel %vm192, %v166, 0
    %v203 = vsel %vm192, %v167, 0
    %205 = vmatpush.msra.mxu0 0.0
    %206 = vmatpush.msra.mxu0 0.0
    %207 = vmatpush.msra.mxu0 0.0
    %208 = vmatpush.msra.mxu0 0.0
    %209 = vmatpush.msra.mxu0 0.0
    %210 = vmatpush.msra.mxu0 0.0
    %211 = vmatpush.msra.mxu0 0.0
    %212 = vmatpush.msra.mxu0 0.0
    %213 = vmatpush.msra.mxu0 0.0
    %214 = vmatpush.msra.mxu0 0.0
    %215 = vmatpush.msra.mxu0 0.0
    %216 = vmatpush.msra.mxu0 0.0
    %217 = vmatpush.msra.mxu0 %v163
    %218 = vmatpush.msra.mxu0 %v162
    %219 = vmatpush.msra.mxu0 %v161
    %220 = vmatpush.msra.mxu0 %v160
    %221 = vmatmul.f32.gmra.mxu0 %v194
    %v222 = vpop.f32.mrf.mxu0
    %v223 = vadd.f32 %v175, %v222
    %224 = vmatmul.f32.gmra.mxu0 %v197
    %v225 = vpop.f32.mrf.mxu0
    %v226 = vadd.f32 %v180, %v225
    %227 = vmatmul.f32.gmra.mxu0 %v200
    %v228 = vpop.f32.mrf.mxu0
    %v229 = vadd.f32 %v185, %v228
    %230 = vmatmul.f32.gmra.mxu0 %v203
    %v231 = vpop.f32.mrf.mxu0
    %v232 = vadd.f32 %v190, %v231
    %233 = vdwg.mxu0
    %v234 = vmax.f32 %v223, 0.0
    %v235 = vmax.f32 %v226, 0.0
    %v236 = vmax.f32 %v229, 0.0
    %v237 = vmax.f32 %v232, 0.0
    %v238 = vld [vmem:[%s5] sm:$0x3]
    %v239 = vld [vmem:[%s6] sm:$0x3]
    %241 = vset.pattern.permute.xlu0 0
    %242 = vperm.xlu0 %241, %v239
    %v243 = vpop.permute.xlu0 %242
    %v246 = vsel %vm192, %v238, 0
    %248 = vmatpush.msra.mxu0 0.0
    %249 = vmatpush.msra.mxu0 0.0
    %250 = vmatpush.msra.mxu0 0.0
    %251 = vmatpush.msra.mxu0 0.0
    %252 = vmatpush.msra.mxu0 0.0
    %253 = vmatpush.msra.mxu0 0.0
    %254 = vmatpush.msra.mxu0 0.0
    %255 = vmatpush.msra.mxu0 0.0
    %256 = vmatpush.msra.mxu0 0.0
    %257 = vmatpush.msra.mxu0 0.0
    %258 = vmatpush.msra.mxu0 0.0
    %259 = vmatpush.msra.mxu0 0.0
    %260 = vmatpush.msra.mxu0 %v237
    %261 = vmatpush.msra.mxu0 %v236
    %262 = vmatpush.msra.mxu0 %v235
    %263 = vmatpush.msra.mxu0 %v234
    %264 = vmatmul.f32.gmra.mxu0 %v246
    %v265 = vpop.f32.mrf.mxu0
    %v266 = vadd.f32 %v243, %v265
    %267 = vdwg.mxu0
    %268 = vst [vmem:[#allocation2] sm:$0x3] %v266
    // Predicated region
    $region30: #{tpu_custom_call.1} parent=1 // pred_check
      _
    $region31: #{tpu_custom_call.1} parent=1 // pred_check_branch
      %270 = sbr.rel (0) target = $region33
    $region32: #{tpu_custom_call.1} parent=1 // pred_region
      %272 = vsyncadd [#allocation3], 0
      %s274 = sshll.u32 [#allocation2], 4
      %s275 = int_to_ptr.vmem [resolvable:$true] %s274
      %s276 = sshll.u32 %s7, 4
      %s277 = int_to_ptr.hbm [resolvable:$true] %s276
      %279 = dma.vmem_to_hbm [thread:$0]  %s275, 32, %s277, [#allocation3]
    $region33: #{tpu_custom_call.1} parent=1 // pred_fallthru
      _
    // Predicated region
    $region34: #{tpu_custom_call.1} parent=1 // pred_check
      _
    $region35: #{tpu_custom_call.1} parent=1 // pred_check_branch
      %281 = sbr.rel (0) target = $region37
    $region36: #{tpu_custom_call.1} parent=1 // pred_region
      %283 = dma.done [#allocation3], 32
    $region37: #{tpu_custom_call.1} parent=1 // pred_fallthru
      _
    %284 = vsyncpa [#allocation3], 1

</llo_original>
